<compile_context>
chip_gen: v5e
topology: v5e:2x2
jax: 0.10.0
libtpu: 0.0.40
codegen_flags: <defaults>
</compile_context>

<pallas_src>
import functools

import jax
import jax.numpy as jnp
from jax.experimental import pallas as pl
from jax.experimental.pallas import tpu as pltpu


def _mha_kernel(xq_ref, xk_ref, xv_ref,
                wq_ref, bq_ref, wk_ref, bk_ref, wv_ref, bv_ref,
                wo_ref, bo_ref,
                out_ref, attn_ref=None, *,
                n_head, d_k, d_v, compute_dtype):
    """One batch tile per grid step. All matmuls hit the MXU with fused rows."""
    Bt, Lq, D = xq_ref.shape
    Lk = xk_ref.shape[1]
    Lv = xv_ref.shape[1]
    M = Bt * Lq

    # Fuse (batch, seq) rows into the MXU M dimension (leading-dim reshape only).
    xq = xq_ref[...].reshape(M, D)            # f32, also the residual
    xk = xk_ref[...].reshape(Bt * Lk, D)
    xv = xv_ref[...].reshape(Bt * Lv, D)

    xq_c = xq.astype(compute_dtype)
    xk_c = xk.astype(compute_dtype)
    xv_c = xv.astype(compute_dtype)

    acc = jnp.zeros((M, D), jnp.float32)      # fused output-projection accumulator
    attn_heads = []

    for h in range(n_head):                   # static unroll over heads
        # Per-head lane-aligned weight slabs (leading-axis index, no lane slicing).
        # 1/sqrt(d_k) has been folded into wq/bq at prep time.
        qh = jnp.dot(xq_c, wq_ref[h].astype(compute_dtype),
                     preferred_element_type=jnp.float32) + bq_ref[h]
        kh = jnp.dot(xk_c, wk_ref[h].astype(compute_dtype),
                     preferred_element_type=jnp.float32) + bk_ref[h]
        vh = jnp.dot(xv_c, wv_ref[h].astype(compute_dtype),
                     preferred_element_type=jnp.float32) + bv_ref[h]

        qh = qh.reshape(Bt, Lq, d_k)
        kh = kh.reshape(Bt, Lk, d_k)
        vh = vh.reshape(Bt, Lv, d_v)

        # scores + numerically stable softmax; divide goes to the EUP slot.
        s = jnp.einsum('bqd,bkd->bqk',
                       qh.astype(compute_dtype), kh.astype(compute_dtype),
                       preferred_element_type=jnp.float32)
        s = s - jnp.max(s, axis=-1, keepdims=True)
        e = jnp.exp(s)
        p = e * pl.reciprocal(jnp.sum(e, axis=-1, keepdims=True), approx=True)
        if attn_ref is not None:
            attn_heads.append(p)

        # Attention output folded straight into the fc projection: accumulate
        # per head instead of concatenating 16-lane slices along the lane axis.
        o_h = jnp.einsum('bqk,bkd->bqd',
                         p.astype(compute_dtype), vh.astype(compute_dtype),
                         preferred_element_type=jnp.float32)
        acc = acc + jnp.dot(o_h.reshape(M, d_v).astype(compute_dtype),
                            wo_ref[h].astype(compute_dtype),
                            preferred_element_type=jnp.float32)

    # bias + residual (dropouts are identity in eval mode); single store.
    y = acc + bo_ref[...] + xq
    out_ref[...] = y.reshape(Bt, Lq, D).astype(out_ref.dtype)

    if attn_ref is not None:
        # One stacked store per grid step instead of n_head partial stores.
        attn_ref[...] = jnp.stack(attn_heads, axis=1).astype(attn_ref.dtype)


def multi_head_attention(q, k, v, kparams, *, n_head, d_k, d_v,
                         batch_tile=None, return_attn=True,
                         compute_dtype=jnp.float32):
    """q, k, v: (B, L, d_model). kparams: output of prepare_params(...)."""
    B, Lq, D = q.shape
    Lk = k.shape[1]
    Lv = v.shape[1]
    wq_h, bq_h, wk_h, bk_h, wv_h, bv_h, wo_h, bo = kparams

    if batch_tile is None:
        # Keep >= 2 grid steps (so both v7x TensorCores get work) while still
        # fusing batch rows into the MXU M dimension when B is large.
        # On v5e (1 TC, overhead/store-bound at tiny shapes) pass batch_tile=B.
        batch_tile = (B // 2) if (B >= 2 and B % 2 == 0) else 1
    assert B % batch_tile == 0, "batch_tile must divide the batch size"
    Bt = batch_tile
    n_tiles = B // Bt

    kernel = functools.partial(_mha_kernel, n_head=n_head, d_k=d_k, d_v=d_v,
                               compute_dtype=compute_dtype)

    # Weights/biases: full-array blocks, constant index map (kept resident).
    # NOTE: at real model sizes, single-buffer these (pipeline_mode=pl.Buffered(1))
    # to halve the weight VMEM footprint (matters on v7x's 64 MiB VMEM).
    def wspec(shape):
        n = len(shape)
        return pl.BlockSpec(shape, lambda b, _n=n: (0,) * _n)

    in_specs = [
        pl.BlockSpec((Bt, Lq, D), lambda b: (b, 0, 0)),
        pl.BlockSpec((Bt, Lk, D), lambda b: (b, 0, 0)),
        pl.BlockSpec((Bt, Lv, D), lambda b: (b, 0, 0)),
        wspec(wq_h.shape), wspec(bq_h.shape),
        wspec(wk_h.shape), wspec(bk_h.shape),
        wspec(wv_h.shape), wspec(bv_h.shape),
        wspec(wo_h.shape), wspec(bo.shape),
    ]

    out_shape = [jax.ShapeDtypeStruct((B, Lq, D), q.dtype)]
    out_specs = [pl.BlockSpec((Bt, Lq, D), lambda b: (b, 0, 0))]
    if return_attn:
        out_shape.append(jax.ShapeDtypeStruct((B, n_head, Lq, Lk), jnp.float32))
        out_specs.append(pl.BlockSpec((Bt, n_head, Lq, Lk),
                                      lambda b: (b, 0, 0, 0)))

    res = pl.pallas_call(
        kernel,
        out_shape=tuple(out_shape),
        grid=(n_tiles,),
        in_specs=in_specs,
        out_specs=tuple(out_specs),
        compiler_params=pltpu.CompilerParams(
            dimension_semantics=("parallel",)),
    )(q, k, v, wq_h, bq_h, wk_h, bk_h, wv_h, bv_h, wo_h, bo)

    if return_attn:
        return res          # (out, attn)
    return res[0]           # out only (skips O(B*H*L^2) attn writeback)


def init_params(key, d_model, n_head, d_k, d_v):
    """Module-equivalent params: orthogonal weights (in, out) layout, zero biases."""
    ortho = jax.nn.initializers.orthogonal()
    k1, k2, k3, k4 = jax.random.split(key, 4)
    wq = ortho(k1, (d_model, n_head * d_k), jnp.float32)
    wk = ortho(k2, (d_model, n_head * d_k), jnp.float32)
    wv = ortho(k3, (d_model, n_head * d_v), jnp.float32)
    wo = ortho(k4, (n_head * d_v, d_model), jnp.float32)
    bq = jnp.zeros((1, n_head * d_k), jnp.float32)
    bk = jnp.zeros((1, n_head * d_k), jnp.float32)
    bv = jnp.zeros((1, n_head * d_v), jnp.float32)
    bo = jnp.zeros((1, d_model), jnp.float32)
    return (wq, bq, wk, bk, wv, bv, wo, bo)


def prepare_params(params, *, n_head, d_k, d_v):
    """One-time rearrangement into kernel layout:
       - per-head lane-aligned weight slabs,
       - 1/sqrt(d_k) folded into the Q projection."""
    wq, bq, wk, bk, wv, bv, wo, bo = params
    d_model = wq.shape[0]
    inv_temp = 1.0 / (d_k ** 0.5)

    wq_h = (wq * inv_temp).reshape(d_model, n_head, d_k).transpose(1, 0, 2)  # (H, D, d_k)
    bq_h = (bq * inv_temp).reshape(n_head, 1, d_k)                           # (H, 1, d_k)
    wk_h = wk.reshape(d_model, n_head, d_k).transpose(1, 0, 2)               # (H, D, d_k)
    bk_h = bk.reshape(n_head, 1, d_k)
    wv_h = wv.reshape(d_model, n_head, d_v).transpose(1, 0, 2)               # (H, D, d_v)
    bv_h = bv.reshape(n_head, 1, d_v)
    wo_h = wo.reshape(n_head, d_v, d_model)                                  # (H, d_v, D)
    bo_2 = bo.reshape(1, d_model)
    return (wq_h, bq_h, wk_h, bk_h, wv_h, bv_h, wo_h, bo_2)


def reference(q, k, v, params, n_head, d_k, d_v):
    """Pure-JAX reference mirroring the PyTorch forward (eval mode, mask=None)."""
    wq, bq, wk, bk, wv, bv, wo, bo = params
    B, Lq, D = q.shape
    Lk, Lv = k.shape[1], v.shape[1]
    residual = q
    qp = (q @ wq + bq).reshape(B, Lq, n_head, d_k).transpose(0, 2, 1, 3)
    kp = (k @ wk + bk).reshape(B, Lk, n_head, d_k).transpose(0, 2, 1, 3)
    vp = (v @ wv + bv).reshape(B, Lv, n_head, d_v).transpose(0, 2, 1, 3)
    s = jnp.einsum("bhqd,bhkd->bhqk", qp / (d_k ** 0.5), kp)
    attn = jax.nn.softmax(s, axis=-1)
    o = jnp.einsum("bhqk,bhkd->bhqd", attn, vp)
    o = o.transpose(0, 2, 1, 3).reshape(B, Lq, n_head * d_v)
    out = o @ wo + bo + residual
    return out, attn


if __name__ == "__main__":
    B, L, d_model = 2, 8, 32
    n_head, d_k, d_v = 2, 16, 16

    key = jax.random.PRNGKey(0)
    kq, kk, kv, kp = jax.random.split(key, 4)
    q = jax.random.normal(kq, (B, L, d_model), jnp.float32)
    k = jax.random.normal(kk, (B, L, d_model), jnp.float32)
    v = jax.random.normal(kv, (B, L, d_model), jnp.float32)

    params = init_params(kp, d_model, n_head, d_k, d_v)
    kparams = prepare_params(params, n_head=n_head, d_k=d_k, d_v=d_v)

    out, attn = multi_head_attention(q, k, v, kparams,
                                     n_head=n_head, d_k=d_k, d_v=d_v)
    jax.block_until_ready((out, attn))

    out_ref, attn_ref = reference(q, k, v, params, n_head, d_k, d_v)
    assert out.shape == (B, L, d_model)
    assert attn.shape == (B, n_head, L, L)
    # Tolerance slightly loosened vs exact-divide version: the softmax uses the
    # EUP approximate reciprocal (pl.reciprocal(..., approx=True)).
    assert jnp.allclose(attn, attn_ref, atol=2e-3), "attn mismatch"
    assert jnp.allclose(out, out_ref, atol=5e-3, rtol=1e-3), "output mismatch"

    # attn-less fast path (skips the attn HBM writeback entirely).
    out2 = multi_head_attention(q, k, v, kparams, n_head=n_head, d_k=d_k,
                                d_v=d_v, return_attn=False)
    jax.block_until_ready(out2)
    assert jnp.allclose(out2, out, atol=1e-5), "return_attn=False mismatch"

    print("KERNEL_OK")
</pallas_src>

<mosaic_0001>
module attributes {stable_mosaic.version = 11 : i64} {
  func.func @_mha_kernel(%arg0: i32, %arg1: memref<1x8x32xf32, #tpu.memory_space<vmem>>, %arg2: memref<1x8x32xf32, #tpu.memory_space<vmem>>, %arg3: memref<1x8x32xf32, #tpu.memory_space<vmem>>, %arg4: memref<2x32x16xf32, #tpu.memory_space<vmem>>, %arg5: memref<2x1x16xf32, #tpu.memory_space<vmem>>, %arg6: memref<2x32x16xf32, #tpu.memory_space<vmem>>, %arg7: memref<2x1x16xf32, #tpu.memory_space<vmem>>, %arg8: memref<2x32x16xf32, #tpu.memory_space<vmem>>, %arg9: memref<2x1x16xf32, #tpu.memory_space<vmem>>, %arg10: memref<2x16x32xf32, #tpu.memory_space<vmem>>, %arg11: memref<1x32xf32, #tpu.memory_space<vmem>>, %arg12: memref<1x8x32xf32, #tpu.memory_space<vmem>>, %arg13: memref<1x2x8x8xf32, #tpu.memory_space<vmem>>) attributes {dimension_semantics = [#tpu.dimension_semantics<parallel>], iteration_bounds = array<i64: 2>, scalar_prefetch = 0 : i64, scratch_operands = 0 : i64, tpu.core_type = #tpu.core_type<tc>, window_params = [{transform_indices = @transform_0, window_bounds = array<i64: 1, 8, 32>}, {transform_indices = @transform_1, window_bounds = array<i64: 1, 8, 32>}, {transform_indices = @transform_2, window_bounds = array<i64: 1, 8, 32>}, {pipeline_mode = #tpu.pipeline_mode<synchronous>, transform_indices = @transform_3, window_bounds = array<i64: 2, 32, 16>}, {pipeline_mode = #tpu.pipeline_mode<synchronous>, transform_indices = @transform_4, window_bounds = array<i64: 2, 1, 16>}, {pipeline_mode = #tpu.pipeline_mode<synchronous>, transform_indices = @transform_5, window_bounds = array<i64: 2, 32, 16>}, {pipeline_mode = #tpu.pipeline_mode<synchronous>, transform_indices = @transform_6, window_bounds = array<i64: 2, 1, 16>}, {pipeline_mode = #tpu.pipeline_mode<synchronous>, transform_indices = @transform_7, window_bounds = array<i64: 2, 32, 16>}, {pipeline_mode = #tpu.pipeline_mode<synchronous>, transform_indices = @transform_8, window_bounds = array<i64: 2, 1, 16>}, {pipeline_mode = #tpu.pipeline_mode<synchronous>, transform_indices = @transform_9, window_bounds = array<i64: 2, 16, 32>}, {pipeline_mode = #tpu.pipeline_mode<synchronous>, transform_indices = @transform_10, window_bounds = array<i64: 1, 32>}, {transform_indices = @transform_11, window_bounds = array<i64: 1, 8, 32>}, {transform_indices = @transform_12, window_bounds = array<i64: 1, 2, 8, 8>}]} {
    %c0 = arith.constant 0 : index
    %c0_0 = arith.constant 0 : index
    %c0_1 = arith.constant 0 : index
    %0 = vector.load %arg1[%c0, %c0_0, %c0_1] : memref<1x8x32xf32, #tpu.memory_space<vmem>>, vector<1x8x32xf32>
    %1 = vector.shape_cast %0 : vector<1x8x32xf32> to vector<8x32xf32>
    %c0_2 = arith.constant 0 : index
    %c0_3 = arith.constant 0 : index
    %c0_4 = arith.constant 0 : index
    %2 = vector.load %arg2[%c0_2, %c0_3, %c0_4] : memref<1x8x32xf32, #tpu.memory_space<vmem>>, vector<1x8x32xf32>
    %3 = vector.shape_cast %2 : vector<1x8x32xf32> to vector<8x32xf32>
    %c0_5 = arith.constant 0 : index
    %c0_6 = arith.constant 0 : index
    %c0_7 = arith.constant 0 : index
    %4 = vector.load %arg3[%c0_5, %c0_6, %c0_7] : memref<1x8x32xf32, #tpu.memory_space<vmem>>, vector<1x8x32xf32>
    %5 = vector.shape_cast %4 : vector<1x8x32xf32> to vector<8x32xf32>
    %cst = arith.constant 0.000000e+00 : f32
    %6 = vector.broadcast %cst : f32 to vector<8x32xf32>
    %c0_8 = arith.constant 0 : index
    %c0_9 = arith.constant 0 : index
    %c0_10 = arith.constant 0 : index
    %7 = vector.load %arg4[%c0_8, %c0_9, %c0_10] : memref<2x32x16xf32, #tpu.memory_space<vmem>>, vector<1x32x16xf32>
    %8 = vector.shape_cast %7 : vector<1x32x16xf32> to vector<32x16xf32>
    %cst_11 = arith.constant dense<0.000000e+00> : vector<8x16xf32>
    %9 = tpu.matmul %1, %8, %cst_11 {dimension_numbers = #tpu.dot_dimension_numbers<[1], [0], [0], [1], [0, 0, 1, 1], [], []>} : vector<8x32xf32>, vector<32x16xf32>, vector<8x16xf32> -> vector<8x16xf32>
    %c0_12 = arith.constant 0 : index
    %c0_13 = arith.constant 0 : index
    %c0_14 = arith.constant 0 : index
    %10 = vector.load %arg5[%c0_12, %c0_13, %c0_14] : memref<2x1x16xf32, #tpu.memory_space<vmem>>, vector<1x1x16xf32>
    %11 = vector.shape_cast %10 : vector<1x1x16xf32> to vector<1x16xf32>
    %12 = vector.broadcast %11 : vector<1x16xf32> to vector<8x16xf32>
    %13 = arith.addf %9, %12 : vector<8x16xf32>
    %c0_15 = arith.constant 0 : index
    %c0_16 = arith.constant 0 : index
    %c0_17 = arith.constant 0 : index
    %14 = vector.load %arg6[%c0_15, %c0_16, %c0_17] : memref<2x32x16xf32, #tpu.memory_space<vmem>>, vector<1x32x16xf32>
    %15 = vector.shape_cast %14 : vector<1x32x16xf32> to vector<32x16xf32>
    %cst_18 = arith.constant dense<0.000000e+00> : vector<8x16xf32>
    %16 = tpu.matmul %3, %15, %cst_18 {dimension_numbers = #tpu.dot_dimension_numbers<[1], [0], [0], [1], [0, 0, 1, 1], [], []>} : vector<8x32xf32>, vector<32x16xf32>, vector<8x16xf32> -> vector<8x16xf32>
    %c0_19 = arith.constant 0 : index
    %c0_20 = arith.constant 0 : index
    %c0_21 = arith.constant 0 : index
    %17 = vector.load %arg7[%c0_19, %c0_20, %c0_21] : memref<2x1x16xf32, #tpu.memory_space<vmem>>, vector<1x1x16xf32>
    %18 = vector.shape_cast %17 : vector<1x1x16xf32> to vector<1x16xf32>
    %19 = vector.broadcast %18 : vector<1x16xf32> to vector<8x16xf32>
    %20 = arith.addf %16, %19 : vector<8x16xf32>
    %c0_22 = arith.constant 0 : index
    %c0_23 = arith.constant 0 : index
    %c0_24 = arith.constant 0 : index
    %21 = vector.load %arg8[%c0_22, %c0_23, %c0_24] : memref<2x32x16xf32, #tpu.memory_space<vmem>>, vector<1x32x16xf32>
    %22 = vector.shape_cast %21 : vector<1x32x16xf32> to vector<32x16xf32>
    %cst_25 = arith.constant dense<0.000000e+00> : vector<8x16xf32>
    %23 = tpu.matmul %5, %22, %cst_25 {dimension_numbers = #tpu.dot_dimension_numbers<[1], [0], [0], [1], [0, 0, 1, 1], [], []>} : vector<8x32xf32>, vector<32x16xf32>, vector<8x16xf32> -> vector<8x16xf32>
    %c0_26 = arith.constant 0 : index
    %c0_27 = arith.constant 0 : index
    %c0_28 = arith.constant 0 : index
    %24 = vector.load %arg9[%c0_26, %c0_27, %c0_28] : memref<2x1x16xf32, #tpu.memory_space<vmem>>, vector<1x1x16xf32>
    %25 = vector.shape_cast %24 : vector<1x1x16xf32> to vector<1x16xf32>
    %26 = vector.broadcast %25 : vector<1x16xf32> to vector<8x16xf32>
    %27 = arith.addf %23, %26 : vector<8x16xf32>
    %28 = vector.shape_cast %13 : vector<8x16xf32> to vector<1x8x16xf32>
    %29 = vector.shape_cast %20 : vector<8x16xf32> to vector<1x8x16xf32>
    %30 = vector.shape_cast %27 : vector<8x16xf32> to vector<1x8x16xf32>
    "tpu.trace_start"() <{level = 10 : i32, message = "bqd,bkd->bqk"}> : () -> ()
    %cst_29 = arith.constant dense<0.000000e+00> : vector<1x8x8xf32>
    %31 = tpu.matmul %28, %29, %cst_29 {dimension_numbers = #tpu.dot_dimension_numbers<[2], [2], [1], [1], [0, 0, 0, 1, 1, 1], [0], [0]>} : vector<1x8x16xf32>, vector<1x8x16xf32>, vector<1x8x8xf32> -> vector<1x8x8xf32>
    "tpu.trace_stop"() : () -> ()
    %cst_30 = arith.constant dense<0xFF800000> : vector<1x8xf32>
    %32 = vector.multi_reduction <maximumf>, %31, %cst_30 [2] : vector<1x8x8xf32> to vector<1x8xf32>
    %33 = vector.shape_cast %32 : vector<1x8xf32> to vector<1x8x1xf32>
    %34 = vector.broadcast %33 : vector<1x8x1xf32> to vector<1x8x8xf32>
    %35 = arith.subf %31, %34 : vector<1x8x8xf32>
    %36 = math.exp %35 : vector<1x8x8xf32>
    %cst_31 = arith.constant dense<0.000000e+00> : vector<1x8xf32>
    %37 = vector.multi_reduction <add>, %36, %cst_31 [2] : vector<1x8x8xf32> to vector<1x8xf32>
    %38 = vector.shape_cast %37 : vector<1x8xf32> to vector<1x8x1xf32>
    %39 = tpu.reciprocal %38 {approx = true} : vector<1x8x1xf32> -> vector<1x8x1xf32>
    %40 = vector.broadcast %39 : vector<1x8x1xf32> to vector<1x8x8xf32>
    %41 = arith.mulf %36, %40 : vector<1x8x8xf32>
    "tpu.trace_start"() <{level = 10 : i32, message = "bqk,bkd->bqd"}> : () -> ()
    %cst_32 = arith.constant dense<0.000000e+00> : vector<1x8x16xf32>
    %42 = tpu.matmul %41, %30, %cst_32 {dimension_numbers = #tpu.dot_dimension_numbers<[2], [1], [1], [2], [0, 0, 0, 1, 1, 2], [0], [0]>} : vector<1x8x8xf32>, vector<1x8x16xf32>, vector<1x8x16xf32> -> vector<1x8x16xf32>
    "tpu.trace_stop"() : () -> ()
    %43 = vector.shape_cast %42 : vector<1x8x16xf32> to vector<8x16xf32>
    %c0_33 = arith.constant 0 : index
    %c0_34 = arith.constant 0 : index
    %c0_35 = arith.constant 0 : index
    %44 = vector.load %arg10[%c0_33, %c0_34, %c0_35] : memref<2x16x32xf32, #tpu.memory_space<vmem>>, vector<1x16x32xf32>
    %45 = vector.shape_cast %44 : vector<1x16x32xf32> to vector<16x32xf32>
    %cst_36 = arith.constant dense<0.000000e+00> : vector<8x32xf32>
    %46 = tpu.matmul %43, %45, %cst_36 {dimension_numbers = #tpu.dot_dimension_numbers<[1], [0], [0], [1], [0, 0, 1, 1], [], []>} : vector<8x16xf32>, vector<16x32xf32>, vector<8x32xf32> -> vector<8x32xf32>
    %47 = arith.addf %6, %46 : vector<8x32xf32>
    %c1 = arith.constant 1 : index
    %c0_37 = arith.constant 0 : index
    %c0_38 = arith.constant 0 : index
    %48 = vector.load %arg4[%c1, %c0_37, %c0_38] : memref<2x32x16xf32, #tpu.memory_space<vmem>>, vector<1x32x16xf32>
    %49 = vector.shape_cast %48 : vector<1x32x16xf32> to vector<32x16xf32>
    %cst_39 = arith.constant dense<0.000000e+00> : vector<8x16xf32>
    %50 = tpu.matmul %1, %49, %cst_39 {dimension_numbers = #tpu.dot_dimension_numbers<[1], [0], [0], [1], [0, 0, 1, 1], [], []>} : vector<8x32xf32>, vector<32x16xf32>, vector<8x16xf32> -> vector<8x16xf32>
    %c1_40 = arith.constant 1 : index
    %c0_41 = arith.constant 0 : index
    %c0_42 = arith.constant 0 : index
    %51 = vector.load %arg5[%c1_40, %c0_41, %c0_42] : memref<2x1x16xf32, #tpu.memory_space<vmem>>, vector<1x1x16xf32>
    %52 = vector.shape_cast %51 : vector<1x1x16xf32> to vector<1x16xf32>
    %53 = vector.broadcast %52 : vector<1x16xf32> to vector<8x16xf32>
    %54 = arith.addf %50, %53 : vector<8x16xf32>
    %c1_43 = arith.constant 1 : index
    %c0_44 = arith.constant 0 : index
    %c0_45 = arith.constant 0 : index
    %55 = vector.load %arg6[%c1_43, %c0_44, %c0_45] : memref<2x32x16xf32, #tpu.memory_space<vmem>>, vector<1x32x16xf32>
    %56 = vector.shape_cast %55 : vector<1x32x16xf32> to vector<32x16xf32>
    %cst_46 = arith.constant dense<0.000000e+00> : vector<8x16xf32>
    %57 = tpu.matmul %3, %56, %cst_46 {dimension_numbers = #tpu.dot_dimension_numbers<[1], [0], [0], [1], [0, 0, 1, 1], [], []>} : vector<8x32xf32>, vector<32x16xf32>, vector<8x16xf32> -> vector<8x16xf32>
    %c1_47 = arith.constant 1 : index
    %c0_48 = arith.constant 0 : index
    %c0_49 = arith.constant 0 : index
    %58 = vector.load %arg7[%c1_47, %c0_48, %c0_49] : memref<2x1x16xf32, #tpu.memory_space<vmem>>, vector<1x1x16xf32>
    %59 = vector.shape_cast %58 : vector<1x1x16xf32> to vector<1x16xf32>
    %60 = vector.broadcast %59 : vector<1x16xf32> to vector<8x16xf32>
    %61 = arith.addf %57, %60 : vector<8x16xf32>
    %c1_50 = arith.constant 1 : index
    %c0_51 = arith.constant 0 : index
    %c0_52 = arith.constant 0 : index
    %62 = vector.load %arg8[%c1_50, %c0_51, %c0_52] : memref<2x32x16xf32, #tpu.memory_space<vmem>>, vector<1x32x16xf32>
    %63 = vector.shape_cast %62 : vector<1x32x16xf32> to vector<32x16xf32>
    %cst_53 = arith.constant dense<0.000000e+00> : vector<8x16xf32>
    %64 = tpu.matmul %5, %63, %cst_53 {dimension_numbers = #tpu.dot_dimension_numbers<[1], [0], [0], [1], [0, 0, 1, 1], [], []>} : vector<8x32xf32>, vector<32x16xf32>, vector<8x16xf32> -> vector<8x16xf32>
    %c1_54 = arith.constant 1 : index
    %c0_55 = arith.constant 0 : index
    %c0_56 = arith.constant 0 : index
    %65 = vector.load %arg9[%c1_54, %c0_55, %c0_56] : memref<2x1x16xf32, #tpu.memory_space<vmem>>, vector<1x1x16xf32>
    %66 = vector.shape_cast %65 : vector<1x1x16xf32> to vector<1x16xf32>
    %67 = vector.broadcast %66 : vector<1x16xf32> to vector<8x16xf32>
    %68 = arith.addf %64, %67 : vector<8x16xf32>
    %69 = vector.shape_cast %54 : vector<8x16xf32> to vector<1x8x16xf32>
    %70 = vector.shape_cast %61 : vector<8x16xf32> to vector<1x8x16xf32>
    %71 = vector.shape_cast %68 : vector<8x16xf32> to vector<1x8x16xf32>
    "tpu.trace_start"() <{level = 10 : i32, message = "bqd,bkd->bqk"}> : () -> ()
    %cst_57 = arith.constant dense<0.000000e+00> : vector<1x8x8xf32>
    %72 = tpu.matmul %69, %70, %cst_57 {dimension_numbers = #tpu.dot_dimension_numbers<[2], [2], [1], [1], [0, 0, 0, 1, 1, 1], [0], [0]>} : vector<1x8x16xf32>, vector<1x8x16xf32>, vector<1x8x8xf32> -> vector<1x8x8xf32>
    "tpu.trace_stop"() : () -> ()
    %cst_58 = arith.constant dense<0xFF800000> : vector<1x8xf32>
    %73 = vector.multi_reduction <maximumf>, %72, %cst_58 [2] : vector<1x8x8xf32> to vector<1x8xf32>
    %74 = vector.shape_cast %73 : vector<1x8xf32> to vector<1x8x1xf32>
    %75 = vector.broadcast %74 : vector<1x8x1xf32> to vector<1x8x8xf32>
    %76 = arith.subf %72, %75 : vector<1x8x8xf32>
    %77 = math.exp %76 : vector<1x8x8xf32>
    %cst_59 = arith.constant dense<0.000000e+00> : vector<1x8xf32>
    %78 = vector.multi_reduction <add>, %77, %cst_59 [2] : vector<1x8x8xf32> to vector<1x8xf32>
    %79 = vector.shape_cast %78 : vector<1x8xf32> to vector<1x8x1xf32>
    %80 = tpu.reciprocal %79 {approx = true} : vector<1x8x1xf32> -> vector<1x8x1xf32>
    %81 = vector.broadcast %80 : vector<1x8x1xf32> to vector<1x8x8xf32>
    %82 = arith.mulf %77, %81 : vector<1x8x8xf32>
    "tpu.trace_start"() <{level = 10 : i32, message = "bqk,bkd->bqd"}> : () -> ()
    %cst_60 = arith.constant dense<0.000000e+00> : vector<1x8x16xf32>
    %83 = tpu.matmul %82, %71, %cst_60 {dimension_numbers = #tpu.dot_dimension_numbers<[2], [1], [1], [2], [0, 0, 0, 1, 1, 2], [0], [0]>} : vector<1x8x8xf32>, vector<1x8x16xf32>, vector<1x8x16xf32> -> vector<1x8x16xf32>
    "tpu.trace_stop"() : () -> ()
    %84 = vector.shape_cast %83 : vector<1x8x16xf32> to vector<8x16xf32>
    %c1_61 = arith.constant 1 : index
    %c0_62 = arith.constant 0 : index
    %c0_63 = arith.constant 0 : index
    %85 = vector.load %arg10[%c1_61, %c0_62, %c0_63] : memref<2x16x32xf32, #tpu.memory_space<vmem>>, vector<1x16x32xf32>
    %86 = vector.shape_cast %85 : vector<1x16x32xf32> to vector<16x32xf32>
    %cst_64 = arith.constant dense<0.000000e+00> : vector<8x32xf32>
    %87 = tpu.matmul %84, %86, %cst_64 {dimension_numbers = #tpu.dot_dimension_numbers<[1], [0], [0], [1], [0, 0, 1, 1], [], []>} : vector<8x16xf32>, vector<16x32xf32>, vector<8x32xf32> -> vector<8x32xf32>
    %88 = arith.addf %47, %87 : vector<8x32xf32>
    %c0_65 = arith.constant 0 : index
    %c0_66 = arith.constant 0 : index
    %89 = vector.load %arg11[%c0_65, %c0_66] : memref<1x32xf32, #tpu.memory_space<vmem>>, vector<1x32xf32>
    %90 = vector.broadcast %89 : vector<1x32xf32> to vector<8x32xf32>
    %91 = arith.addf %88, %90 : vector<8x32xf32>
    %92 = arith.addf %91, %1 : vector<8x32xf32>
    %93 = vector.shape_cast %92 : vector<8x32xf32> to vector<1x8x32xf32>
    %c0_67 = arith.constant 0 : index
    %c0_68 = arith.constant 0 : index
    %c0_69 = arith.constant 0 : index
    %94 = vector.load %arg12[%c0_67, %c0_68, %c0_69] : memref<1x8x32xf32, #tpu.memory_space<vmem>>, vector<1x8x32xf32>
    tpu.vector_store %arg12[%c0_67, %c0_68, %c0_69], %93 {strides = array<i32>} : memref<1x8x32xf32, #tpu.memory_space<vmem>>, vector<1x8x32xf32>,
    %95 = vector.shape_cast %41 : vector<1x8x8xf32> to vector<1x1x8x8xf32>
    %96 = vector.shape_cast %82 : vector<1x8x8xf32> to vector<1x1x8x8xf32>
    %97 = tpu.concatenate %95, %96 in 1 : vector<1x1x8x8xf32>, vector<1x1x8x8xf32> -> vector<1x2x8x8xf32>
    %c0_70 = arith.constant 0 : index
    %c0_71 = arith.constant 0 : index
    %c0_72 = arith.constant 0 : index
    %c0_73 = arith.constant 0 : index
    %98 = vector.load %arg13[%c0_70, %c0_71, %c0_72, %c0_73] : memref<1x2x8x8xf32, #tpu.memory_space<vmem>>, vector<1x2x8x8xf32>
    tpu.vector_store %arg13[%c0_70, %c0_71, %c0_72, %c0_73], %97 {strides = array<i32>} : memref<1x2x8x8xf32, #tpu.memory_space<vmem>>, vector<1x2x8x8xf32>,
    return
  }
  func.func @transform_0(%arg0: i32) -> (i32, i32, i32) {
    %c0_i32 = arith.constant 0 : i32
    %c0_i32_0 = arith.constant 0 : i32
    %c0_i32_1 = arith.constant 0 : i32
    return %arg0, %c0_i32, %c0_i32_0 : i32, i32, i32
  }
  func.func @transform_1(%arg0: i32) -> (i32, i32, i32) {
    %c0_i32 = arith.constant 0 : i32
    %c0_i32_0 = arith.constant 0 : i32
    %c0_i32_1 = arith.constant 0 : i32
    return %arg0, %c0_i32, %c0_i32_0 : i32, i32, i32
  }
  func.func @transform_2(%arg0: i32) -> (i32, i32, i32) {
    %c0_i32 = arith.constant 0 : i32
    %c0_i32_0 = arith.constant 0 : i32
    %c0_i32_1 = arith.constant 0 : i32
    return %arg0, %c0_i32, %c0_i32_0 : i32, i32, i32
  }
  func.func @transform_3(%arg0: i32) -> (i32, i32, i32) {
    %c0_i32 = arith.constant 0 : i32
    %c0_i32_0 = arith.constant 0 : i32
    %c0_i32_1 = arith.constant 0 : i32
    %c0_i32_2 = arith.constant 0 : i32
    return %c0_i32, %c0_i32_0, %c0_i32_1 : i32, i32, i32
  }
  func.func @transform_4(%arg0: i32) -> (i32, i32, i32) {
    %c0_i32 = arith.constant 0 : i32
    %c0_i32_0 = arith.constant 0 : i32
    %c0_i32_1 = arith.constant 0 : i32
    %c0_i32_2 = arith.constant 0 : i32
    return %c0_i32, %c0_i32_0, %c0_i32_1 : i32, i32, i32
  }
  func.func @transform_5(%arg0: i32) -> (i32, i32, i32) {
    %c0_i32 = arith.constant 0 : i32
    %c0_i32_0 = arith.constant 0 : i32
    %c0_i32_1 = arith.constant 0 : i32
    %c0_i32_2 = arith.constant 0 : i32
    return %c0_i32, %c0_i32_0, %c0_i32_1 : i32, i32, i32
  }
  func.func @transform_6(%arg0: i32) -> (i32, i32, i32) {
    %c0_i32 = arith.constant 0 : i32
    %c0_i32_0 = arith.constant 0 : i32
    %c0_i32_1 = arith.constant 0 : i32
    %c0_i32_2 = arith.constant 0 : i32
    return %c0_i32, %c0_i32_0, %c0_i32_1 : i32, i32, i32
  }
  func.func @transform_7(%arg0: i32) -> (i32, i32, i32) {
    %c0_i32 = arith.constant 0 : i32
    %c0_i32_0 = arith.constant 0 : i32
    %c0_i32_1 = arith.constant 0 : i32
    %c0_i32_2 = arith.constant 0 : i32
    return %c0_i32, %c0_i32_0, %c0_i32_1 : i32, i32, i32
  }
  func.func @transform_8(%arg0: i32) -> (i32, i32, i32) {
    %c0_i32 = arith.constant 0 : i32
    %c0_i32_0 = arith.constant 0 : i32
    %c0_i32_1 = arith.constant 0 : i32
    %c0_i32_2 = arith.constant 0 : i32
    return %c0_i32, %c0_i32_0, %c0_i32_1 : i32, i32, i32
  }
  func.func @transform_9(%arg0: i32) -> (i32, i32, i32) {
    %c0_i32 = arith.constant 0 : i32
    %c0_i32_0 = arith.constant 0 : i32
    %c0_i32_1 = arith.constant 0 : i32
    %c0_i32_2 = arith.constant 0 : i32
    return %c0_i32, %c0_i32_0, %c0_i32_1 : i32, i32, i32
  }
  func.func @transform_10(%arg0: i32) -> (i32, i32) {
    %c0_i32 = arith.constant 0 : i32
    %c0_i32_0 = arith.constant 0 : i32
    %c0_i32_1 = arith.constant 0 : i32
    return %c0_i32, %c0_i32_0 : i32, i32
  }
  func.func @transform_11(%arg0: i32) -> (i32, i32, i32) {
    %c0_i32 = arith.constant 0 : i32
    %c0_i32_0 = arith.constant 0 : i32
    %c0_i32_1 = arith.constant 0 : i32
    return %arg0, %c0_i32, %c0_i32_0 : i32, i32, i32
  }
  func.func @transform_12(%arg0: i32) -> (i32, i32, i32, i32) {
    %c0_i32 = arith.constant 0 : i32
    %c0_i32_0 = arith.constant 0 : i32
    %c0_i32_1 = arith.constant 0 : i32
    %c0_i32_2 = arith.constant 0 : i32
    return %arg0, %c0_i32, %c0_i32_0, %c0_i32_1 : i32, i32, i32, i32
  }
}

</mosaic_0001>

<llo_original>
// kernel: tpu_custom_call.1
$region0: #{tpu_custom_call.1}
  #allocation0 [shape = 'u32[]', space=smem, size = 0x4, offset = 0x4, fixed_abs, tag = 'smem constant byte address 0x4 - core index']
  #allocation1 [shape = 'u32[72,128]{1,0:T(1,128)}', space=vmem, size = 0x9000, scoped, tag = 'internal scratch']
  %s0 = inlined_call_operand.vmem [shape: f32[2,8,32], index: 0, kind: input, shape index: {}]
  %s1 = inlined_call_operand.vmem [shape: f32[2,8,32], index: 1, kind: input, shape index: {}]
  %s2 = inlined_call_operand.vmem [shape: f32[2,8,32], index: 2, kind: input, shape index: {}]
  %s3 = inlined_call_operand.vmem [shape: f32[2,32,16], index: 3, kind: input, shape index: {}]
  %s4 = inlined_call_operand.vmem [shape: f32[2,1,16], index: 4, kind: input, shape index: {}]
  %s5 = inlined_call_operand.vmem [shape: f32[2,32,16], index: 5, kind: input, shape index: {}]
  %s6 = inlined_call_operand.vmem [shape: f32[2,1,16], index: 6, kind: input, shape index: {}]
  %s7 = inlined_call_operand.vmem [shape: f32[2,32,16], index: 7, kind: input, shape index: {}]
  %s8 = inlined_call_operand.vmem [shape: f32[2,1,16], index: 8, kind: input, shape index: {}]
  %s9 = inlined_call_operand.vmem [shape: f32[2,16,32], index: 9, kind: input, shape index: {}]
  %s10 = inlined_call_operand.vmem [shape: f32[1,32], index: 10, kind: input, shape index: {}]
  %s11 = inlined_call_operand.hbm [shape: f32[2,8,32], index: 11, kind: output, shape index: {0}]
  %s12 = inlined_call_operand.hbm [shape: f32[2,2,8,8], index: 12, kind: output, shape index: {1}]
  %13 = xla_tuple %s11, %s12
  %s14 = sld [smem:[#allocation0]]
  $region85: #{tpu_custom_call.1} parent=0
    _
  %s16 = ssub.s32 1, %s14
  %s17 = scalar_select 0, %s16, %s14
  $region1: #{tpu_custom_call.1} parent=0
    #allocation2 [shape = 'u8[8192]{0}', space=vmem, size = 0x2000, scoped, tag = 'output window, operand 0']
    #allocation3 [shape = 's32[2]{0}', space=sflag, size = 0x8, scoped, tag = 'scoped memory for tpu_custom_call.1']
    #allocation4 [shape = 'u8[16384]{0}', space=vmem, size = 0x4000, scoped, tag = 'output window, operand 1']
    #allocation5 [shape = 's32[2]{0}', space=sflag, size = 0x8, scoped, tag = 'scoped memory for tpu_custom_call.1']
    %18 = vsyncpa [#allocation3], 0
    %s19 = scalar_lea.sflag [#allocation3], 1
    %20 = vsyncpa %s19, 0
    %21 = vsyncpa [#allocation5], 0
    %s22 = scalar_lea.sflag [#allocation5], 1
    %23 = vsyncpa %s22, 0
    loop: start=0, step=1, limit=4
    $region2: #{tpu_custom_call.1} parent=1 // loop_pre_header
      _
    $region3: #{tpu_custom_call.1} parent=1 // loop_header
      %s25 = sphi 0, %s29
      %p26 = scmp.ge.s32.totalorder %s25, 4
      %s35 = sphi 0, %s37
      %s38 = sphi 0, %s35
      %s39 = sphi 0, %s38
      %s55 = sphi 0, %s39
      %s61 = sphi 0, %s63
      %s64 = sphi 0, %s61
      %s65 = sphi 0, %s64
      %s81 = sphi 0, %s65
      %s87 = sphi 0, %s89
      %s90 = sphi 0, %s87
      %s91 = sphi 0, %s90
      %s107 = sphi 0, %s91
      %s111 = sphi 0, %s111
      %s113 = sphi 0, %s111
      %s114 = sphi 0, %s113
      %s128 = sphi 0, %s114
      %s132 = sphi 0, %s132
      %s134 = sphi 0, %s132
      %s135 = sphi 0, %s134
      %s149 = sphi 0, %s135
      %s153 = sphi 0, %s153
      %s155 = sphi 0, %s153
      %s156 = sphi 0, %s155
      %s170 = sphi 0, %s156
      %s174 = sphi 0, %s174
      %s176 = sphi 0, %s174
      %s177 = sphi 0, %s176
      %s191 = sphi 0, %s177
      %s195 = sphi 0, %s195
      %s197 = sphi 0, %s195
      %s198 = sphi 0, %s197
      %s212 = sphi 0, %s198
      %s216 = sphi 0, %s216
      %s218 = sphi 0, %s216
      %s219 = sphi 0, %s218
      %s233 = sphi 0, %s219
      %s237 = sphi 0, %s237
      %s239 = sphi 0, %s237
      %s240 = sphi 0, %s239
      %s254 = sphi 0, %s240
      %s258 = sphi 0, %s258
      %s260 = sphi 0, %s258
      %s261 = sphi 0, %s260
      %s275 = sphi 0, %s261
      %s281 = sphi 0, %s283
      %s284 = sphi 0, %s281
      %s285 = sphi 0, %s284
      %s301 = sphi 0, %s285
      %s307 = sphi 0, %s309
      %s310 = sphi 0, %s307
      %s311 = sphi 0, %s310
      %s327 = sphi 0, %s311
    $region4: #{tpu_custom_call.1} parent=1 // loop_header_branch
      %28 = sbr.rel (%p26) target = $region8
    $region5: #{tpu_custom_call.1} parent=1 // loop_body
      %s30 = ssub.s32 %s25, 1
      %s31 = ssub.s32 %s25, 2
      %s32 = sadd.s32 %s25, 1
      %s33 = ssub.s32 %s25, %s32
      %p34 = scmp.eq.s32.totalorder %s33, 0
      %s36 = sadd.s32 %s35, 1
      %s37 = scalar_select %p34, %s35, %s36
      %p40 = pneg %p34
      %p41 = scmp.eq.s32.totalorder %s25, 1
      %p42 = por %p40, %p41
      %p43 = scmp.ne.s32.totalorder %s35, %s38
      %p44 = scmp.eq.s32.totalorder %s25, 0
      %p45 = por %p43, %p44
      %p46 = scmp.ne.s32.totalorder %s35, %s38
      %p47 = scmp.eq.s32.totalorder %s30, 1
      %p48 = por %p46, %p47
      %p49 = scmp.ne.s32.totalorder %s38, %s39
      %p50 = scmp.eq.s32.totalorder %s30, 0
      %p51 = por %p49, %p50
      %p52 = scmp.ne.s32.totalorder %s38, %s39
      %p53 = scmp.eq.s32.totalorder %s31, 1
      %p54 = por %p52, %p53
      %p56 = scmp.ne.s32.totalorder %s39, %s55
      %p57 = scmp.eq.s32.totalorder %s31, 0
      %p58 = por %p56, %p57
      %s59 = ssub.s32 %s25, %s32
      %p60 = scmp.eq.s32.totalorder %s59, 0
      %s62 = sadd.s32 %s61, 1
      %s63 = scalar_select %p60, %s61, %s62
      %p66 = pneg %p60
      %p67 = scmp.eq.s32.totalorder %s25, 1
      %p68 = por %p66, %p67
      %p69 = scmp.ne.s32.totalorder %s61, %s64
      %p70 = scmp.eq.s32.totalorder %s25, 0
      %p71 = por %p69, %p70
      %p72 = scmp.ne.s32.totalorder %s61, %s64
      %p73 = scmp.eq.s32.totalorder %s30, 1
      %p74 = por %p72, %p73
      %p75 = scmp.ne.s32.totalorder %s64, %s65
      %p76 = scmp.eq.s32.totalorder %s30, 0
      %p77 = por %p75, %p76
      %p78 = scmp.ne.s32.totalorder %s64, %s65
      %p79 = scmp.eq.s32.totalorder %s31, 1
      %p80 = por %p78, %p79
      %p82 = scmp.ne.s32.totalorder %s65, %s81
      %p83 = scmp.eq.s32.totalorder %s31, 0
      %p84 = por %p82, %p83
      %s85 = ssub.s32 %s25, %s32
      %p86 = scmp.eq.s32.totalorder %s85, 0
      %s88 = sadd.s32 %s87, 1
      %s89 = scalar_select %p86, %s87, %s88
      %p92 = pneg %p86
      %p93 = scmp.eq.s32.totalorder %s25, 1
      %p94 = por %p92, %p93
      %p95 = scmp.ne.s32.totalorder %s87, %s90
      %p96 = scmp.eq.s32.totalorder %s25, 0
      %p97 = por %p95, %p96
      %p98 = scmp.ne.s32.totalorder %s87, %s90
      %p99 = scmp.eq.s32.totalorder %s30, 1
      %p100 = por %p98, %p99
      %p101 = scmp.ne.s32.totalorder %s90, %s91
      %p102 = scmp.eq.s32.totalorder %s30, 0
      %p103 = por %p101, %p102
      %p104 = scmp.ne.s32.totalorder %s90, %s91
      %p105 = scmp.eq.s32.totalorder %s31, 1
      %p106 = por %p104, %p105
      %p108 = scmp.ne.s32.totalorder %s91, %s107
      %p109 = scmp.eq.s32.totalorder %s31, 0
      %p110 = por %p108, %p109
      %s112 = sadd.s32 %s111, 1
      %p115 = scmp.eq.s32.totalorder %s25, 1
      %p116 = scmp.ne.s32.totalorder %s111, %s113
      %p117 = scmp.eq.s32.totalorder %s25, 0
      %p118 = por %p116, %p117
      %p119 = scmp.ne.s32.totalorder %s111, %s113
      %p120 = scmp.eq.s32.totalorder %s30, 1
      %p121 = por %p119, %p120
      %p122 = scmp.ne.s32.totalorder %s113, %s114
      %p123 = scmp.eq.s32.totalorder %s30, 0
      %p124 = por %p122, %p123
      %p125 = scmp.ne.s32.totalorder %s113, %s114
      %p126 = scmp.eq.s32.totalorder %s31, 1
      %p127 = por %p125, %p126
      %p129 = scmp.ne.s32.totalorder %s114, %s128
      %p130 = scmp.eq.s32.totalorder %s31, 0
      %p131 = por %p129, %p130
      %s133 = sadd.s32 %s132, 1
      %p136 = scmp.eq.s32.totalorder %s25, 1
      %p137 = scmp.ne.s32.totalorder %s132, %s134
      %p138 = scmp.eq.s32.totalorder %s25, 0
      %p139 = por %p137, %p138
      %p140 = scmp.ne.s32.totalorder %s132, %s134
      %p141 = scmp.eq.s32.totalorder %s30, 1
      %p142 = por %p140, %p141
      %p143 = scmp.ne.s32.totalorder %s134, %s135
      %p144 = scmp.eq.s32.totalorder %s30, 0
      %p145 = por %p143, %p144
      %p146 = scmp.ne.s32.totalorder %s134, %s135
      %p147 = scmp.eq.s32.totalorder %s31, 1
      %p148 = por %p146, %p147
      %p150 = scmp.ne.s32.totalorder %s135, %s149
      %p151 = scmp.eq.s32.totalorder %s31, 0
      %p152 = por %p150, %p151
      %s154 = sadd.s32 %s153, 1
      %p157 = scmp.eq.s32.totalorder %s25, 1
      %p158 = scmp.ne.s32.totalorder %s153, %s155
      %p159 = scmp.eq.s32.totalorder %s25, 0
      %p160 = por %p158, %p159
      %p161 = scmp.ne.s32.totalorder %s153, %s155
      %p162 = scmp.eq.s32.totalorder %s30, 1
      %p163 = por %p161, %p162
      %p164 = scmp.ne.s32.totalorder %s155, %s156
      %p165 = scmp.eq.s32.totalorder %s30, 0
      %p166 = por %p164, %p165
      %p167 = scmp.ne.s32.totalorder %s155, %s156
      %p168 = scmp.eq.s32.totalorder %s31, 1
      %p169 = por %p167, %p168
      %p171 = scmp.ne.s32.totalorder %s156, %s170
      %p172 = scmp.eq.s32.totalorder %s31, 0
      %p173 = por %p171, %p172
      %s175 = sadd.s32 %s174, 1
      %p178 = scmp.eq.s32.totalorder %s25, 1
      %p179 = scmp.ne.s32.totalorder %s174, %s176
      %p180 = scmp.eq.s32.totalorder %s25, 0
      %p181 = por %p179, %p180
      %p182 = scmp.ne.s32.totalorder %s174, %s176
      %p183 = scmp.eq.s32.totalorder %s30, 1
      %p184 = por %p182, %p183
      %p185 = scmp.ne.s32.totalorder %s176, %s177
      %p186 = scmp.eq.s32.totalorder %s30, 0
      %p187 = por %p185, %p186
      %p188 = scmp.ne.s32.totalorder %s176, %s177
      %p189 = scmp.eq.s32.totalorder %s31, 1
      %p190 = por %p188, %p189
      %p192 = scmp.ne.s32.totalorder %s177, %s191
      %p193 = scmp.eq.s32.totalorder %s31, 0
      %p194 = por %p192, %p193
      %s196 = sadd.s32 %s195, 1
      %p199 = scmp.eq.s32.totalorder %s25, 1
      %p200 = scmp.ne.s32.totalorder %s195, %s197
      %p201 = scmp.eq.s32.totalorder %s25, 0
      %p202 = por %p200, %p201
      %p203 = scmp.ne.s32.totalorder %s195, %s197
      %p204 = scmp.eq.s32.totalorder %s30, 1
      %p205 = por %p203, %p204
      %p206 = scmp.ne.s32.totalorder %s197, %s198
      %p207 = scmp.eq.s32.totalorder %s30, 0
      %p208 = por %p206, %p207
      %p209 = scmp.ne.s32.totalorder %s197, %s198
      %p210 = scmp.eq.s32.totalorder %s31, 1
      %p211 = por %p209, %p210
      %p213 = scmp.ne.s32.totalorder %s198, %s212
      %p214 = scmp.eq.s32.totalorder %s31, 0
      %p215 = por %p213, %p214
      %s217 = sadd.s32 %s216, 1
      %p220 = scmp.eq.s32.totalorder %s25, 1
      %p221 = scmp.ne.s32.totalorder %s216, %s218
      %p222 = scmp.eq.s32.totalorder %s25, 0
      %p223 = por %p221, %p222
      %p224 = scmp.ne.s32.totalorder %s216, %s218
      %p225 = scmp.eq.s32.totalorder %s30, 1
      %p226 = por %p224, %p225
      %p227 = scmp.ne.s32.totalorder %s218, %s219
      %p228 = scmp.eq.s32.totalorder %s30, 0
      %p229 = por %p227, %p228
      %p230 = scmp.ne.s32.totalorder %s218, %s219
      %p231 = scmp.eq.s32.totalorder %s31, 1
      %p232 = por %p230, %p231
      %p234 = scmp.ne.s32.totalorder %s219, %s233
      %p235 = scmp.eq.s32.totalorder %s31, 0
      %p236 = por %p234, %p235
      %s238 = sadd.s32 %s237, 1
      %p241 = scmp.eq.s32.totalorder %s25, 1
      %p242 = scmp.ne.s32.totalorder %s237, %s239
      %p243 = scmp.eq.s32.totalorder %s25, 0
      %p244 = por %p242, %p243
      %p245 = scmp.ne.s32.totalorder %s237, %s239
      %p246 = scmp.eq.s32.totalorder %s30, 1
      %p247 = por %p245, %p246
      %p248 = scmp.ne.s32.totalorder %s239, %s240
      %p249 = scmp.eq.s32.totalorder %s30, 0
      %p250 = por %p248, %p249
      %p251 = scmp.ne.s32.totalorder %s239, %s240
      %p252 = scmp.eq.s32.totalorder %s31, 1
      %p253 = por %p251, %p252
      %p255 = scmp.ne.s32.totalorder %s240, %s254
      %p256 = scmp.eq.s32.totalorder %s31, 0
      %p257 = por %p255, %p256
      %s259 = sadd.s32 %s258, 1
      %p262 = scmp.eq.s32.totalorder %s25, 1
      %p263 = scmp.ne.s32.totalorder %s258, %s260
      %p264 = scmp.eq.s32.totalorder %s25, 0
      %p265 = por %p263, %p264
      %p266 = scmp.ne.s32.totalorder %s258, %s260
      %p267 = scmp.eq.s32.totalorder %s30, 1
      %p268 = por %p266, %p267
      %p269 = scmp.ne.s32.totalorder %s260, %s261
      %p270 = scmp.eq.s32.totalorder %s30, 0
      %p271 = por %p269, %p270
      %p272 = scmp.ne.s32.totalorder %s260, %s261
      %p273 = scmp.eq.s32.totalorder %s31, 1
      %p274 = por %p272, %p273
      %p276 = scmp.ne.s32.totalorder %s261, %s275
      %p277 = scmp.eq.s32.totalorder %s31, 0
      %p278 = por %p276, %p277
      %s279 = ssub.s32 %s25, %s32
      %p280 = scmp.eq.s32.totalorder %s279, 0
      %s282 = sadd.s32 %s281, 1
      %s283 = scalar_select %p280, %s281, %s282
      %p286 = pneg %p280
      %p287 = scmp.eq.s32.totalorder %s25, 1
      %p288 = por %p286, %p287
      %p289 = scmp.ne.s32.totalorder %s281, %s284
      %p290 = scmp.eq.s32.totalorder %s25, 0
      %p291 = por %p289, %p290
      %p292 = scmp.ne.s32.totalorder %s281, %s284
      %p293 = scmp.eq.s32.totalorder %s30, 1
      %p294 = por %p292, %p293
      %p295 = scmp.ne.s32.totalorder %s284, %s285
      %p296 = scmp.eq.s32.totalorder %s30, 0
      %p297 = por %p295, %p296
      %p298 = scmp.ne.s32.totalorder %s284, %s285
      %p299 = scmp.eq.s32.totalorder %s31, 1
      %p300 = por %p298, %p299
      %p302 = scmp.ne.s32.totalorder %s285, %s301
      %p303 = scmp.eq.s32.totalorder %s31, 0
      %p304 = por %p302, %p303
      %s305 = ssub.s32 %s25, %s32
      %p306 = scmp.eq.s32.totalorder %s305, 0
      %s308 = sadd.s32 %s307, 1
      %s309 = scalar_select %p306, %s307, %s308
      %p312 = pneg %p306
      %p313 = scmp.eq.s32.totalorder %s25, 1
      %p314 = por %p312, %p313
      %p315 = scmp.ne.s32.totalorder %s307, %s310
      %p316 = scmp.eq.s32.totalorder %s25, 0
      %p317 = por %p315, %p316
      %p318 = scmp.ne.s32.totalorder %s307, %s310
      %p319 = scmp.eq.s32.totalorder %s30, 1
      %p320 = por %p318, %p319
      %p321 = scmp.ne.s32.totalorder %s310, %s311
      %p322 = scmp.eq.s32.totalorder %s30, 0
      %p323 = por %p321, %p322
      %p324 = scmp.ne.s32.totalorder %s310, %s311
      %p325 = scmp.eq.s32.totalorder %s31, 1
      %p326 = por %p324, %p325
      %p328 = scmp.ne.s32.totalorder %s311, %s327
      %p329 = scmp.eq.s32.totalorder %s31, 0
      %p330 = por %p328, %p329
      %p331 = scmp.le.s32.totalorder 1, %s25
      %p332 = scmp.lt.s32.totalorder %s25, 3
      %p333 = pnand %p331, %p332
      %p334 = pneg %p333
      // Predicated region
      $region9: #{tpu_custom_call.1} parent=5 // pred_check
        _
      $region10: #{tpu_custom_call.1} parent=5 // pred_check_branch
        %336 = sbr.rel (%p333) target = $region12
      $region11: #{tpu_custom_call.1} parent=5 // pred_region
        %s337 = ssub.s32 %s25, 1
        // Predicated region
        $region13: #{tpu_custom_call.1} parent=11 // pred_check
          %p338 = pneg %p124
        $region14: #{tpu_custom_call.1} parent=11 // pred_check_branch
          %340 = sbr.rel (%p338) target = $region16
        $region15: #{tpu_custom_call.1} parent=11 // pred_region
          _
        $region16: #{tpu_custom_call.1} parent=11 // pred_fallthru
          _
        // Predicated region
        $region17: #{tpu_custom_call.1} parent=11 // pred_check
          %p341 = pneg %p145
        $region18: #{tpu_custom_call.1} parent=11 // pred_check_branch
          %343 = sbr.rel (%p341) target = $region20
        $region19: #{tpu_custom_call.1} parent=11 // pred_region
          _
        $region20: #{tpu_custom_call.1} parent=11 // pred_fallthru
          _
        // Predicated region
        $region21: #{tpu_custom_call.1} parent=11 // pred_check
          %p344 = pneg %p166
        $region22: #{tpu_custom_call.1} parent=11 // pred_check_branch
          %346 = sbr.rel (%p344) target = $region24
        $region23: #{tpu_custom_call.1} parent=11 // pred_region
          _
        $region24: #{tpu_custom_call.1} parent=11 // pred_fallthru
          _
        // Predicated region
        $region25: #{tpu_custom_call.1} parent=11 // pred_check
          %p347 = pneg %p187
        $region26: #{tpu_custom_call.1} parent=11 // pred_check_branch
          %349 = sbr.rel (%p347) target = $region28
        $region27: #{tpu_custom_call.1} parent=11 // pred_region
          _
        $region28: #{tpu_custom_call.1} parent=11 // pred_fallthru
          _
        // Predicated region
        $region29: #{tpu_custom_call.1} parent=11 // pred_check
          %p350 = pneg %p208
        $region30: #{tpu_custom_call.1} parent=11 // pred_check_branch
          %352 = sbr.rel (%p350) target = $region32
        $region31: #{tpu_custom_call.1} parent=11 // pred_region
          _
        $region32: #{tpu_custom_call.1} parent=11 // pred_fallthru
          _
        // Predicated region
        $region33: #{tpu_custom_call.1} parent=11 // pred_check
          %p353 = pneg %p229
        $region34: #{tpu_custom_call.1} parent=11 // pred_check_branch
          %355 = sbr.rel (%p353) target = $region36
        $region35: #{tpu_custom_call.1} parent=11 // pred_region
          _
        $region36: #{tpu_custom_call.1} parent=11 // pred_fallthru
          _
        // Predicated region
        $region37: #{tpu_custom_call.1} parent=11 // pred_check
          %p356 = pneg %p250
        $region38: #{tpu_custom_call.1} parent=11 // pred_check_branch
          %358 = sbr.rel (%p356) target = $region40
        $region39: #{tpu_custom_call.1} parent=11 // pred_region
          _
        $region40: #{tpu_custom_call.1} parent=11 // pred_fallthru
          _
        // Predicated region
        $region41: #{tpu_custom_call.1} parent=11 // pred_check
          %p359 = pneg %p271
        $region42: #{tpu_custom_call.1} parent=11 // pred_check_branch
          %361 = sbr.rel (%p359) target = $region44
        $region43: #{tpu_custom_call.1} parent=11 // pred_region
          _
        $region44: #{tpu_custom_call.1} parent=11 // pred_fallthru
          _
      $region12: #{tpu_custom_call.1} parent=5 // pred_fallthru
        _
      %p362 = scmp.lt.s32.totalorder %s25, 2
      // Predicated region
      $region45: #{tpu_custom_call.1} parent=5 // pred_check
        %p363 = pneg %p362
      $region46: #{tpu_custom_call.1} parent=5 // pred_check_branch
        %365 = sbr.rel (%p363) target = $region48
      $region47: #{tpu_custom_call.1} parent=5 // pred_region
        // Predicated region
        $region49: #{tpu_custom_call.1} parent=47 // pred_check
          %p366 = pneg %p45
        $region50: #{tpu_custom_call.1} parent=47 // pred_check_branch
          %368 = sbr.rel (%p366) target = $region52
        $region51: #{tpu_custom_call.1} parent=47 // pred_region
          %p369 = scmp.lt.s32.totalorder %s25, 1
          %s370 = scalar_select %p369, %s25, 1
          %s371 = smul.addr %s370, 8
          %s372 = scalar_lea.vmem %s0, %s371
        $region52: #{tpu_custom_call.1} parent=47 // pred_fallthru
          _
        // Predicated region
        $region53: #{tpu_custom_call.1} parent=47 // pred_check
          %p373 = pneg %p71
        $region54: #{tpu_custom_call.1} parent=47 // pred_check_branch
          %375 = sbr.rel (%p373) target = $region56
        $region55: #{tpu_custom_call.1} parent=47 // pred_region
          %p376 = scmp.lt.s32.totalorder %s25, 1
          %s377 = scalar_select %p376, %s25, 1
          %s378 = smul.addr %s377, 8
          %s379 = scalar_lea.vmem %s1, %s378
        $region56: #{tpu_custom_call.1} parent=47 // pred_fallthru
          _
        // Predicated region
        $region57: #{tpu_custom_call.1} parent=47 // pred_check
          %p380 = pneg %p97
        $region58: #{tpu_custom_call.1} parent=47 // pred_check_branch
          %382 = sbr.rel (%p380) target = $region60
        $region59: #{tpu_custom_call.1} parent=47 // pred_region
          %p383 = scmp.lt.s32.totalorder %s25, 1
          %s384 = scalar_select %p383, %s25, 1
          %s385 = smul.addr %s384, 8
          %s386 = scalar_lea.vmem %s2, %s385
        $region60: #{tpu_custom_call.1} parent=47 // pred_fallthru
          _
      $region48: #{tpu_custom_call.1} parent=5 // pred_fallthru
        _
      %p387 = scmp.le.s32.totalorder 1, %s25
      %p388 = scmp.lt.s32.totalorder %s25, 3
      %p389 = pnand %p387, %p388
      %p390 = pneg %p389
      // Predicated region
      $region61: #{tpu_custom_call.1} parent=5 // pred_check
        _
      $region62: #{tpu_custom_call.1} parent=5 // pred_check_branch
        %392 = sbr.rel (%p389) target = $region64
      $region63: #{tpu_custom_call.1} parent=5 // pred_region
        %s393 = ssub.s32 %s25, 1
        %p394 = scmp.lt.s32.totalorder %s30, 1
        %s395 = scalar_select %p394, %s30, 1
        %s396 = smul.addr %s395, 8
        %s397 = scalar_lea.vmem %s0, %s396
        %p398 = pneg %p51
        %p399 = pneg %p48
        %p400 = scmp.lt.s32.totalorder %s30, 1
        %s401 = scalar_select %p400, %s30, 1
        %s402 = smul.addr %s401, 8
        %s403 = scalar_lea.vmem %s1, %s402
        %p404 = pneg %p77
        %p405 = pneg %p74
        %p406 = scmp.lt.s32.totalorder %s30, 1
        %s407 = scalar_select %p406, %s30, 1
        %s408 = smul.addr %s407, 8
        %s409 = scalar_lea.vmem %s2, %s408
        %p410 = pneg %p103
        %p411 = pneg %p100
        %p412 = pneg %p124
        %p413 = pneg %p121
        %p414 = pneg %p145
        %p415 = pneg %p142
        %p416 = pneg %p166
        %p417 = pneg %p163
        %p418 = pneg %p187
        %p419 = pneg %p184
        %p420 = pneg %p208
        %p421 = pneg %p205
        %p422 = pneg %p229
        %p423 = pneg %p226
        %p424 = pneg %p250
        %p425 = pneg %p247
        %p426 = pneg %p271
        %p427 = pneg %p268
        %p428 = pneg %p297
        %p429 = pneg %p294
        %s430 = sand.u32 %s284, 1
        %s431 = scalar_lea.sflag [#allocation3], %s430
        %s432 = sand.u32 %s284, 1
        %s433 = smul.addr %s432, 8
        %s434 = scalar_lea.vmem [#allocation2], %s433
        %p435 = pneg %p323
        %p436 = pneg %p320
        %s437 = sand.u32 %s310, 1
        %s438 = scalar_lea.sflag [#allocation5], %s437
        %s439 = sand.u32 %s310, 1
        %s440 = smul.addr %s439, 16
        %s441 = scalar_lea.vmem [#allocation4], %s440
        %p442 = scmp.lt.s32.totalorder %s30, 1
        %s443 = scalar_select %p442, %s30, 1
        %s444 = smul.addr %s443, 8
        %s445 = scalar_lea.vmem %s0, %s444
        %p446 = scmp.lt.s32.totalorder %s30, 1
        %s447 = scalar_select %p446, %s30, 1
        %s448 = smul.addr %s447, 8
        %s449 = scalar_lea.vmem %s1, %s448
        %p450 = scmp.lt.s32.totalorder %s30, 1
        %s451 = scalar_select %p450, %s30, 1
        %s452 = smul.addr %s451, 8
        %s453 = scalar_lea.vmem %s2, %s452
        %v454 = vld [vmem:[%s445] sm:$0xff]
        %v455 = vld [vmem:[%s449] sm:$0xff]
        %v456 = vld [vmem:[%s453] sm:$0xff]
        %v457 = vld [vmem:[%s3] sm:$0xff]
        %v458 = vld [vmem:[%s3 + $0x8] sm:$0xff]
        %v459 = vld [vmem:[%s3 + $0x10] sm:$0xff]
        %v460 = vld [vmem:[%s3 + $0x18] sm:$0xff]
        %v461 = vld [vmem:[%s4] sm:$0x1]
        %v463 = vperm.slane %v461, 0
        %vm465 = vcmask 261120
        %v467 = vsel %vm465, %v454, 0
        %469 = vmatpush.msra.mxu0 0.0
        %470 = vmatpush.msra.mxu0 0.0
        %471 = vmatpush.msra.mxu0 0.0
        %472 = vmatpush.msra.mxu0 0.0
        %473 = vmatpush.msra.mxu0 0.0
        %474 = vmatpush.msra.mxu0 0.0
        %475 = vmatpush.msra.mxu0 0.0
        %476 = vmatpush.msra.mxu0 0.0
        %477 = vmatpush.msra.mxu0 0.0
        %478 = vmatpush.msra.mxu0 0.0
        %479 = vmatpush.msra.mxu0 0.0
        %480 = vmatpush.msra.mxu0 0.0
        %481 = vmatpush.msra.mxu0 %v460
        %482 = vmatpush.msra.mxu0 %v459
        %483 = vmatpush.msra.mxu0 %v458
        %484 = vmatpush.msra.mxu0 %v457
        %485 = vmatmul.f32.gmra.mxu0 %v467
        %v486 = vpop.f32.mrf.mxu0
        %v487 = vadd.f32 %v463, %v486
        %488 = vdwg.mxu0
        %v489 = vld [vmem:[%s5] sm:$0xff]
        %v490 = vld [vmem:[%s5 + $0x8] sm:$0xff]
        %v491 = vld [vmem:[%s5 + $0x10] sm:$0xff]
        %v492 = vld [vmem:[%s5 + $0x18] sm:$0xff]
        %v493 = vld [vmem:[%s6] sm:$0x1]
        %v495 = vperm.slane %v493, 0
        %v498 = vsel %vm465, %v455, 0
        %500 = vmatpush.msra.mxu0 0.0
        %501 = vmatpush.msra.mxu0 0.0
        %502 = vmatpush.msra.mxu0 0.0
        %503 = vmatpush.msra.mxu0 0.0
        %504 = vmatpush.msra.mxu0 0.0
        %505 = vmatpush.msra.mxu0 0.0
        %506 = vmatpush.msra.mxu0 0.0
        %507 = vmatpush.msra.mxu0 0.0
        %508 = vmatpush.msra.mxu0 0.0
        %509 = vmatpush.msra.mxu0 0.0
        %510 = vmatpush.msra.mxu0 0.0
        %511 = vmatpush.msra.mxu0 0.0
        %512 = vmatpush.msra.mxu0 %v492
        %513 = vmatpush.msra.mxu0 %v491
        %514 = vmatpush.msra.mxu0 %v490
        %515 = vmatpush.msra.mxu0 %v489
        %516 = vmatmul.f32.gmra.mxu0 %v498
        %v517 = vpop.f32.mrf.mxu0
        %v518 = vadd.f32 %v495, %v517
        %519 = vdwg.mxu0
        %v520 = vld [vmem:[%s7] sm:$0xff]
        %v521 = vld [vmem:[%s7 + $0x8] sm:$0xff]
        %v522 = vld [vmem:[%s7 + $0x10] sm:$0xff]
        %v523 = vld [vmem:[%s7 + $0x18] sm:$0xff]
        %v524 = vld [vmem:[%s8] sm:$0x1]
        %v526 = vperm.slane %v524, 0
        %v529 = vsel %vm465, %v456, 0
        %531 = vmatpush.msra.mxu0 0.0
        %532 = vmatpush.msra.mxu0 0.0
        %533 = vmatpush.msra.mxu0 0.0
        %534 = vmatpush.msra.mxu0 0.0
        %535 = vmatpush.msra.mxu0 0.0
        %536 = vmatpush.msra.mxu0 0.0
        %537 = vmatpush.msra.mxu0 0.0
        %538 = vmatpush.msra.mxu0 0.0
        %539 = vmatpush.msra.mxu0 0.0
        %540 = vmatpush.msra.mxu0 0.0
        %541 = vmatpush.msra.mxu0 0.0
        %542 = vmatpush.msra.mxu0 0.0
        %543 = vmatpush.msra.mxu0 %v523
        %544 = vmatpush.msra.mxu0 %v522
        %545 = vmatpush.msra.mxu0 %v521
        %546 = vmatpush.msra.mxu0 %v520
        %547 = vmatmul.f32.gmra.mxu0 %v529
        %v548 = vpop.f32.mrf.mxu0
        %v549 = vadd.f32 %v526, %v548
        %550 = vdwg.mxu0
        %vm551 = vcmask 130048
        %v553 = vsel %vm551, %v487, 0
        %v556 = vsel %vm551, %v518, 0
        %558 = vmatpush.xpose.msra.mxu0 0.0
        %559 = vmatpush.xpose.msra.mxu0 0.0
        %560 = vmatpush.xpose.msra.mxu0 0.0
        %561 = vmatpush.xpose.msra.mxu0 0.0
        %562 = vmatpush.xpose.msra.mxu0 0.0
        %563 = vmatpush.xpose.msra.mxu0 0.0
        %564 = vmatpush.xpose.msra.mxu0 0.0
        %565 = vmatpush.xpose.msra.mxu0 0.0
        %566 = vmatpush.xpose.msra.mxu0 0.0
        %567 = vmatpush.xpose.msra.mxu0 0.0
        %568 = vmatpush.xpose.msra.mxu0 0.0
        %569 = vmatpush.xpose.msra.mxu0 0.0
        %570 = vmatpush.xpose.msra.mxu0 0.0
        %571 = vmatpush.xpose.msra.mxu0 0.0
        %572 = vmatpush.xpose.msra.mxu0 0.0
        %573 = vmatpush.xpose.msra.mxu0 %v556
        %574 = vmatmul.f32.gmra.mxu0 %v553
        %v575 = vpop.f32.mrf.mxu0
        %v576 = vadd.f32 0.0, %v575
        %577 = vdwg.mxu0
        %vm578 = vcmask 64512
        %v579 = vsel %vm578, %v576, -inf
        %580 = vmax.xlane.f32.xlu0 %v579
        %v581 = vpop.xlane.xlu0 %580
        %v582 = vsub.f32 %v576, %v581
        %v583 = vmul.f32 %v582, 1.442695
        %v584 = vpow.pop %v583
        %v585 = vsel %vm578, %v584, 0.0
        %586 = vadd.xlane.f32.xlu0 %v585
        %v587 = vpop.xlane.xlu0 %586
        %v588 = vrcp.pop %v587
        %v589 = vmul.f32 %v584, %v588
        %v591 = vsel %vm578, %v589, 0
        %593 = vmatpush.msra.mxu0 0.0
        %594 = vmatpush.msra.mxu0 0.0
        %595 = vmatpush.msra.mxu0 0.0
        %596 = vmatpush.msra.mxu0 0.0
        %597 = vmatpush.msra.mxu0 0.0
        %598 = vmatpush.msra.mxu0 0.0
        %599 = vmatpush.msra.mxu0 0.0
        %600 = vmatpush.msra.mxu0 0.0
        %601 = vmatpush.msra.mxu0 0.0
        %602 = vmatpush.msra.mxu0 0.0
        %603 = vmatpush.msra.mxu0 0.0
        %604 = vmatpush.msra.mxu0 0.0
        %605 = vmatpush.msra.mxu0 0.0
        %606 = vmatpush.msra.mxu0 0.0
        %607 = vmatpush.msra.mxu0 0.0
        %608 = vmatpush.msra.mxu0 %v549
        %609 = vmatmul.f32.gmra.mxu0 %v591
        %v610 = vpop.f32.mrf.mxu0
        %v611 = vadd.f32 0.0, %v610
        %612 = vdwg.mxu0
        %v613 = vld [vmem:[%s9] sm:$0xff]
        %v614 = vld [vmem:[%s9 + $0x8] sm:$0xff]
        %s615 = scalar_lea.vmem %s3, 32
        %v616 = vld [vmem:[%s615] sm:$0xff]
        %v617 = vld [vmem:[%s615 + $0x8] sm:$0xff]
        %v618 = vld [vmem:[%s615 + $0x10] sm:$0xff]
        %v619 = vld [vmem:[%s615 + $0x18] sm:$0xff]
        %s620 = scalar_lea.vmem %s4, 1
        %v621 = vld [vmem:[%s620] sm:$0x1]
        %v623 = vperm.slane %v621, 0
        %625 = vmatpush.msra.mxu0 0.0
        %626 = vmatpush.msra.mxu0 0.0
        %627 = vmatpush.msra.mxu0 0.0
        %628 = vmatpush.msra.mxu0 0.0
        %629 = vmatpush.msra.mxu0 0.0
        %630 = vmatpush.msra.mxu0 0.0
        %631 = vmatpush.msra.mxu0 0.0
        %632 = vmatpush.msra.mxu0 0.0
        %633 = vmatpush.msra.mxu0 0.0
        %634 = vmatpush.msra.mxu0 0.0
        %635 = vmatpush.msra.mxu0 0.0
        %636 = vmatpush.msra.mxu0 0.0
        %637 = vmatpush.msra.mxu0 %v619
        %638 = vmatpush.msra.mxu0 %v618
        %639 = vmatpush.msra.mxu0 %v617
        %640 = vmatpush.msra.mxu0 %v616
        %641 = vmatmul.f32.gmra.mxu0 %v467
        %v642 = vpop.f32.mrf.mxu0
        %v643 = vadd.f32 %v623, %v642
        %644 = vdwg.mxu0
        %s645 = scalar_lea.vmem %s5, 32
        %v646 = vld [vmem:[%s645] sm:$0xff]
        %v647 = vld [vmem:[%s645 + $0x8] sm:$0xff]
        %v648 = vld [vmem:[%s645 + $0x10] sm:$0xff]
        %v649 = vld [vmem:[%s645 + $0x18] sm:$0xff]
        %s650 = scalar_lea.vmem %s6, 1
        %v651 = vld [vmem:[%s650] sm:$0x1]
        %v653 = vperm.slane %v651, 0
        %655 = vmatpush.msra.mxu0 0.0
        %656 = vmatpush.msra.mxu0 0.0
        %657 = vmatpush.msra.mxu0 0.0
        %658 = vmatpush.msra.mxu0 0.0
        %659 = vmatpush.msra.mxu0 0.0
        %660 = vmatpush.msra.mxu0 0.0
        %661 = vmatpush.msra.mxu0 0.0
        %662 = vmatpush.msra.mxu0 0.0
        %663 = vmatpush.msra.mxu0 0.0
        %664 = vmatpush.msra.mxu0 0.0
        %665 = vmatpush.msra.mxu0 0.0
        %666 = vmatpush.msra.mxu0 0.0
        %667 = vmatpush.msra.mxu0 %v649
        %668 = vmatpush.msra.mxu0 %v648
        %669 = vmatpush.msra.mxu0 %v647
        %670 = vmatpush.msra.mxu0 %v646
        %671 = vmatmul.f32.gmra.mxu0 %v498
        %v672 = vpop.f32.mrf.mxu0
        %v673 = vadd.f32 %v653, %v672
        %674 = vdwg.mxu0
        %s675 = scalar_lea.vmem %s7, 32
        %v676 = vld [vmem:[%s675] sm:$0xff]
        %v677 = vld [vmem:[%s675 + $0x8] sm:$0xff]
        %v678 = vld [vmem:[%s675 + $0x10] sm:$0xff]
        %v679 = vld [vmem:[%s675 + $0x18] sm:$0xff]
        %s680 = scalar_lea.vmem %s8, 1
        %v681 = vld [vmem:[%s680] sm:$0x1]
        %v683 = vperm.slane %v681, 0
        %685 = vmatpush.msra.mxu0 0.0
        %686 = vmatpush.msra.mxu0 0.0
        %687 = vmatpush.msra.mxu0 0.0
        %688 = vmatpush.msra.mxu0 0.0
        %689 = vmatpush.msra.mxu0 0.0
        %690 = vmatpush.msra.mxu0 0.0
        %691 = vmatpush.msra.mxu0 0.0
        %692 = vmatpush.msra.mxu0 0.0
        %693 = vmatpush.msra.mxu0 0.0
        %694 = vmatpush.msra.mxu0 0.0
        %695 = vmatpush.msra.mxu0 0.0
        %696 = vmatpush.msra.mxu0 0.0
        %697 = vmatpush.msra.mxu0 %v679
        %698 = vmatpush.msra.mxu0 %v678
        %699 = vmatpush.msra.mxu0 %v677
        %700 = vmatpush.msra.mxu0 %v676
        %701 = vmatmul.f32.gmra.mxu0 %v529
        %v702 = vpop.f32.mrf.mxu0
        %v703 = vadd.f32 %v683, %v702
        %704 = vdwg.mxu0
        %v706 = vsel %vm551, %v643, 0
        %v709 = vsel %vm551, %v673, 0
        %711 = vmatpush.xpose.msra.mxu0 0.0
        %712 = vmatpush.xpose.msra.mxu0 0.0
        %713 = vmatpush.xpose.msra.mxu0 0.0
        %714 = vmatpush.xpose.msra.mxu0 0.0
        %715 = vmatpush.xpose.msra.mxu0 0.0
        %716 = vmatpush.xpose.msra.mxu0 0.0
        %717 = vmatpush.xpose.msra.mxu0 0.0
        %718 = vmatpush.xpose.msra.mxu0 0.0
        %719 = vmatpush.xpose.msra.mxu0 0.0
        %720 = vmatpush.xpose.msra.mxu0 0.0
        %721 = vmatpush.xpose.msra.mxu0 0.0
        %722 = vmatpush.xpose.msra.mxu0 0.0
        %723 = vmatpush.xpose.msra.mxu0 0.0
        %724 = vmatpush.xpose.msra.mxu0 0.0
        %725 = vmatpush.xpose.msra.mxu0 0.0
        %726 = vmatpush.xpose.msra.mxu0 %v709
        %727 = vmatmul.f32.gmra.mxu0 %v706
        %v728 = vpop.f32.mrf.mxu0
        %v729 = vadd.f32 0.0, %v728
        %730 = vdwg.mxu0
        %v731 = vsel %vm578, %v729, -inf
        %732 = vmax.xlane.f32.xlu0 %v731
        %v733 = vpop.xlane.xlu0 %732
        %v734 = vsub.f32 %v729, %v733
        %v735 = vmul.f32 %v734, 1.442695
        %v736 = vpow.pop %v735
        %v737 = vsel %vm578, %v736, 0.0
        %738 = vadd.xlane.f32.xlu0 %v737
        %v739 = vpop.xlane.xlu0 %738
        %v740 = vrcp.pop %v739
        %v741 = vmul.f32 %v736, %v740
        %v743 = vsel %vm578, %v741, 0
        %745 = vmatpush.msra.mxu0 0.0
        %746 = vmatpush.msra.mxu0 0.0
        %747 = vmatpush.msra.mxu0 0.0
        %748 = vmatpush.msra.mxu0 0.0
        %749 = vmatpush.msra.mxu0 0.0
        %750 = vmatpush.msra.mxu0 0.0
        %751 = vmatpush.msra.mxu0 0.0
        %752 = vmatpush.msra.mxu0 0.0
        %753 = vmatpush.msra.mxu0 0.0
        %754 = vmatpush.msra.mxu0 0.0
        %755 = vmatpush.msra.mxu0 0.0
        %756 = vmatpush.msra.mxu0 0.0
        %757 = vmatpush.msra.mxu0 0.0
        %758 = vmatpush.msra.mxu0 0.0
        %759 = vmatpush.msra.mxu0 0.0
        %760 = vmatpush.msra.mxu0 %v703
        %761 = vmatmul.f32.gmra.mxu0 %v743
        %v762 = vpop.f32.mrf.mxu0
        %v763 = vadd.f32 0.0, %v762
        %764 = vdwg.mxu0
        %s765 = scalar_lea.vmem %s9, 16
        %v766 = vld [vmem:[%s765] sm:$0xff]
        %v767 = vld [vmem:[%s765 + $0x8] sm:$0xff]
        %v769 = vsel %vm551, %v763, 0
        %771 = vmatpush.msra.mxu0 0.0
        %772 = vmatpush.msra.mxu0 0.0
        %773 = vmatpush.msra.mxu0 0.0
        %774 = vmatpush.msra.mxu0 0.0
        %775 = vmatpush.msra.mxu0 0.0
        %776 = vmatpush.msra.mxu0 0.0
        %777 = vmatpush.msra.mxu0 0.0
        %778 = vmatpush.msra.mxu0 0.0
        %779 = vmatpush.msra.mxu0 0.0
        %780 = vmatpush.msra.mxu0 0.0
        %781 = vmatpush.msra.mxu0 0.0
        %782 = vmatpush.msra.mxu0 0.0
        %783 = vmatpush.msra.mxu0 0.0
        %784 = vmatpush.msra.mxu0 0.0
        %785 = vmatpush.msra.mxu0 %v767
        %786 = vmatpush.msra.mxu0 %v766
        %787 = vmatmul.f32.gmra.mxu0 %v769
        %v788 = vpop.f32.mrf.mxu0
        %v789 = vadd.f32 0.0, %v788
        %790 = vdwg.mxu0
        %v792 = vsel %vm551, %v611, 0
        %794 = vmatpush.msra.mxu0 0.0
        %795 = vmatpush.msra.mxu0 0.0
        %796 = vmatpush.msra.mxu0 0.0
        %797 = vmatpush.msra.mxu0 0.0
        %798 = vmatpush.msra.mxu0 0.0
        %799 = vmatpush.msra.mxu0 0.0
        %800 = vmatpush.msra.mxu0 0.0
        %801 = vmatpush.msra.mxu0 0.0
        %802 = vmatpush.msra.mxu0 0.0
        %803 = vmatpush.msra.mxu0 0.0
        %804 = vmatpush.msra.mxu0 0.0
        %805 = vmatpush.msra.mxu0 0.0
        %806 = vmatpush.msra.mxu0 0.0
        %807 = vmatpush.msra.mxu0 0.0
        %808 = vmatpush.msra.mxu0 %v614
        %809 = vmatpush.msra.mxu0 %v613
        %810 = vmatmul.f32.gmra.mxu0 %v792
        %v811 = vpop.f32.mrf.mxu0
        %v812 = vadd.f32 %v789, %v811
        %813 = vdwg.mxu0
        %v814 = vld [vmem:[%s10] sm:$0x1]
        %v816 = vperm.slane %v814, 0
        %v818 = vadd.f32 %v812, %v816
        %v819 = vadd.f32 %v818, %v454
        %820 = vst.msk [vmem:[%s434] sm:$0xff] %vm465, %v819
        %821 = vst.msk [vmem:[%s441] sm:$0xff] %vm578, %v589
        %822 = vst.msk [vmem:[%s441 + $0x8] sm:$0xff] %vm578, %v741
        %s823 = sand.u32 %s284, 1
        %s824 = scalar_lea.sflag [#allocation3], %s823
        %s825 = sand.u32 %s284, 1
        %s826 = smul.addr %s825, 8
        %s827 = scalar_lea.vmem [#allocation2], %s826
        %s828 = sand.u32 %s310, 1
        %s829 = scalar_lea.sflag [#allocation5], %s828
        %s830 = sand.u32 %s310, 1
        %s831 = smul.addr %s830, 16
        %s832 = scalar_lea.vmem [#allocation4], %s831
        // Predicated region
        $region65: #{tpu_custom_call.1} parent=63 // pred_check
          %p833 = pneg %p294
        $region66: #{tpu_custom_call.1} parent=63 // pred_check_branch
          %835 = sbr.rel (%p833) target = $region68
        $region67: #{tpu_custom_call.1} parent=63 // pred_region
          %837 = vsyncadd %s824, 0
          %s838 = smul.addr %s30, 8
          %s839 = scalar_lea.hbm %s11, %s838
          %s841 = sshll.u32 %s827, 4
          %s842 = int_to_ptr.vmem [resolvable:$true] %s841
          %s843 = sshll.u32 %s839, 4
          %s844 = int_to_ptr.hbm [resolvable:$true] %s843
          %846 = dma.vmem_to_hbm [thread:$0]  %s842, 128, %s844, %s824
        $region68: #{tpu_custom_call.1} parent=63 // pred_fallthru
          _
        // Predicated region
        $region69: #{tpu_custom_call.1} parent=63 // pred_check
          %p847 = pneg %p320
        $region70: #{tpu_custom_call.1} parent=63 // pred_check_branch
          %849 = sbr.rel (%p847) target = $region72
        $region71: #{tpu_custom_call.1} parent=63 // pred_region
          %851 = vsyncadd %s829, 0
          %s852 = smul.addr %s30, 2
          %s853 = smul.addr %s852, 8
          %s854 = scalar_lea.hbm %s12, %s853
          %s855 = sshll.u32 %s832, 4
          %s856 = int_to_ptr.vmem [resolvable:$true] %s855
          %s857 = sshll.u32 %s854, 4
          %s858 = int_to_ptr.hbm [resolvable:$true] %s857
          %863 = dma.vmem_to_hbm [thread:$0]  %s856, 256, %s858, %s829, 128, 128, 8
        $region72: #{tpu_custom_call.1} parent=63 // pred_fallthru
          _
      $region64: #{tpu_custom_call.1} parent=5 // pred_fallthru
        _
      %p864 = scmp.le.s32.totalorder 2, %s25
      // Predicated region
      $region73: #{tpu_custom_call.1} parent=5 // pred_check
        %p865 = pneg %p864
      $region74: #{tpu_custom_call.1} parent=5 // pred_check_branch
        %867 = sbr.rel (%p865) target = $region76
      $region75: #{tpu_custom_call.1} parent=5 // pred_region
        %s868 = ssub.s32 %s25, 2
        // Predicated region
        $region77: #{tpu_custom_call.1} parent=75 // pred_check
          %p869 = pneg %p300
        $region78: #{tpu_custom_call.1} parent=75 // pred_check_branch
          %871 = sbr.rel (%p869) target = $region80
        $region79: #{tpu_custom_call.1} parent=75 // pred_region
          %s872 = sand.u32 %s285, 1
          %s873 = scalar_lea.sflag [#allocation3], %s872
          %s874 = sand.u32 %s285, 1
          %s875 = smul.addr %s874, 8
          %s876 = scalar_lea.vmem [#allocation2], %s875
          %878 = dma.done %s873, 128
        $region80: #{tpu_custom_call.1} parent=75 // pred_fallthru
          _
        // Predicated region
        $region81: #{tpu_custom_call.1} parent=75 // pred_check
          %p879 = pneg %p326
        $region82: #{tpu_custom_call.1} parent=75 // pred_check_branch
          %881 = sbr.rel (%p879) target = $region84
        $region83: #{tpu_custom_call.1} parent=75 // pred_region
          %s882 = sand.u32 %s311, 1
          %s883 = scalar_lea.sflag [#allocation5], %s882
          %s884 = sand.u32 %s311, 1
          %s885 = smul.addr %s884, 16
          %s886 = scalar_lea.vmem [#allocation4], %s885
          %888 = dma.done %s883, 256
        $region84: #{tpu_custom_call.1} parent=75 // pred_fallthru
          _
      $region76: #{tpu_custom_call.1} parent=5 // pred_fallthru
        _
    $region6: #{tpu_custom_call.1} parent=1 // loop_footer
      %s29 = sadd.s32 1, %s25
    $region7: #{tpu_custom_call.1} parent=1 // loop_footer_branch
      %24 = sbr.rel target = $region3
    $region8: #{tpu_custom_call.1} parent=1 // loop_exit
      _
    %889 = vsyncpa [#allocation3], 1
    %s890 = scalar_lea.sflag [#allocation3], 1
    %891 = vsyncpa %s890, 1
    %892 = vsyncpa [#allocation5], 1
    %s893 = scalar_lea.sflag [#allocation5], 1
    %894 = vsyncpa %s893, 1

</llo_original>
